<compile_context>
chip_gen: v7x
topology: tpu7x:2x2x1
jax: 0.10.0
libtpu: 0.0.40
codegen_flags: <defaults>
</compile_context>

<pallas_src>
import jax
import jax.numpy as jnp
from jax.experimental import pallas as pl
from jax.experimental.pallas import tpu as pltpu


def _round_up(x, m):
    return ((x + m - 1) // m) * m


def _node_feature_kernel(ids_ref, tab_ref, o_ref):
    # ids_ref: (TR, FK) int32 -- atom-feature ids followed by the (offset)
    #                            in-degree and out-degree ids.
    # tab_ref: (VP, HP) bf16  -- combined (atom | in-deg | out-deg) table.
    # o_ref:   (TR, HP)       -- out dtype (default f32)
    ids = ids_ref[...]                                   # (TR, FK)
    TR, FK = ids.shape
    VP = tab_ref.shape[0]

    # counts[n, v] = #{f : ids[n, f] == v}.  Short static unroll over the FK
    # id columns; each iteration is a 2-D (TR, VP) compare -- never build a
    # 3-D (TR, FK, VP) intermediate.
    iota_v = jax.lax.broadcasted_iota(jnp.int32, (TR, VP), 1)
    counts = jnp.zeros((TR, VP), jnp.float32)
    for f in range(FK):                                  # FK ~ 5, static unroll
        counts = counts + (ids[:, f:f + 1] == iota_v).astype(jnp.float32)

    # One fused bf16 MXU matmul = atom-sum + in-degree + out-degree embeddings.
    # (counts are small integers -> exact in bf16; accumulation is f32.)
    acc = jnp.dot(counts.astype(jnp.bfloat16), tab_ref[...],
                  preferred_element_type=jnp.float32)
    o_ref[...] = acc.astype(o_ref.dtype)


def prepare_combined_table(atom_tab, in_tab, out_tab):
    """Once-per-model: build the padded bf16 combined embedding table.

    Returns (tab, meta): tab is (VP, HP) bf16; meta = (Va, Vi, Vo, H) carries
    the vocab offsets / true hidden dim needed by graph_node_feature.
    """
    Va, H = atom_tab.shape
    Vi = in_tab.shape[0]
    Vo = out_tab.shape[0]
    Vtot = Va + Vi + Vo
    VP = _round_up(Vtot, 128)        # lane-dense MXU contraction dim
    HP = _round_up(H, 128)           # lane-dense (unmasked) output stores
    tab = jnp.concatenate([atom_tab, in_tab, out_tab], axis=0).astype(jnp.bfloat16)
    tab = jnp.pad(tab, ((0, VP - Vtot), (0, HP - H)))    # (VP, HP) bf16
    return tab, (Va, Vi, Vo, H)


def graph_node_feature(x, in_degree, out_degree, tab, meta,
                       out_dtype=jnp.float32):
    """x: (G,N,F) int, degrees: (G,N) int, (tab, meta) from
    prepare_combined_table -> (G, N, H) out_dtype."""
    Va, Vi, Vo, H = meta
    VP, HP = tab.shape
    G, N, F = x.shape
    rows = G * N
    FK = F + 2

    # Fold the degree lookups into the id tensor via offset vocab ids; flat
    # 2-D layout (rows, FK) -- no wasted trailing size-1 dim.
    ids = jnp.concatenate(
        [x.astype(jnp.int32).reshape(rows, F),
         (in_degree.astype(jnp.int32) + Va).reshape(rows, 1),
         (out_degree.astype(jnp.int32) + Va + Vi).reshape(rows, 1)],
        axis=-1)                                         # (rows, FK) int32

    # ----- row-tile selection, gated on the per-generation VMEM budget -----
    try:
        vmem_cap = pltpu.get_tpu_info().vmem_capacity_bytes
    except Exception:
        vmem_cap = 64 << 20          # conservative (v7x-sized) fallback
    # Headroom caps: <=48 MiB on 64 MiB parts (v7x), <=100 MiB on 128 MiB parts.
    vmem_budget = (48 << 20) if vmem_cap <= (64 << 20) else (100 << 20)

    def vmem_need(tr):
        table_b = VP * HP * 2                # Buffered(1): single resident copy
        ids_b = 2 * tr * 128 * 4             # dbl-buffered (TR,FK) -> (TR,128) i32
        out_b = 2 * tr * HP * 4              # dbl-buffered output (f32 worst case)
        counts_b = tr * VP * 12              # f32 counts + iota + compare/bf16 temps
        return table_b + ids_b + out_b + counts_b

    TR = 256
    if rows >= 512 and vmem_need(512) <= vmem_budget:
        TR = 512                              # amortize per-grid-step overhead
    if rows < TR:
        TR = max(_round_up(rows, 8), 8)       # tiny inputs: one tile

    rows_p = _round_up(rows, TR)
    if rows_p != rows:
        ids = jnp.pad(ids, ((0, rows_p - rows), (0, 0)))
    n_tiles = rows_p // TR

    vmem_limit = int(min(max(vmem_need(TR) + (8 << 20), 32 << 20), vmem_budget))

    # TODO(synk): for production-size atom vocabs (~4.6K rows) on v5e the
    #   one-hot matmul is ~10x off the HBM roofline; switch the atom path to a
    #   resident-table gather (per-tile dynamic row reads summed on the VPU).
    out = pl.pallas_call(
        _node_feature_kernel,
        out_shape=jax.ShapeDtypeStruct((rows_p, HP), out_dtype),
        grid=(n_tiles,),
        in_specs=[
            pl.BlockSpec((TR, FK), lambda r: (r, 0)),
            # Constant index_map => table DMA'd once; a second buffer would be
            # pure VMEM waste (halves resident-table footprint).
            pl.BlockSpec((VP, HP), lambda r: (0, 0),
                         pipeline_mode=pl.Buffered(1)),
        ],
        out_specs=pl.BlockSpec((TR, HP), lambda r: (r, 0)),
        compiler_params=pltpu.CompilerParams(
            dimension_semantics=("parallel",),           # megacore sharding
            vmem_limit_bytes=vmem_limit),
    )(ids, tab)

    return out[:rows, :H].reshape(G, N, H)


if __name__ == "__main__":
    # Module hyperparameters (small, consistent with __init__).
    num_heads = 4          # unused by forward
    num_atoms = 16
    num_in_degree = 16
    num_out_degree = 16
    hidden_dim = 32
    n_layers = 2

    # Batch / graph shapes.
    G, N, F = 2, 8, 3

    key = jax.random.PRNGKey(0)
    k1, k2, k3, k4, k5, k6, k7 = jax.random.split(key, 7)

    # Deterministic "init_params"-style parameters (std=0.02 normal embeddings).
    atom_tab = 0.02 * jax.random.normal(k1, (num_atoms + 1, hidden_dim), jnp.float32)
    in_tab = 0.02 * jax.random.normal(k2, (num_in_degree, hidden_dim), jnp.float32)
    out_tab = 0.02 * jax.random.normal(k3, (num_out_degree, hidden_dim), jnp.float32)
    _graph_token = 0.02 * jax.random.normal(k7, (1, hidden_dim), jnp.float32)  # unused in forward

    # Inputs (integer ids).
    x = jax.random.randint(k4, (G, N, F), 0, num_atoms + 1, dtype=jnp.int32)
    in_degree = jax.random.randint(k5, (G, N), 0, num_in_degree, dtype=jnp.int32)
    out_degree = jax.random.randint(k6, (G, N), 0, num_out_degree, dtype=jnp.int32)

    # Once-per-model table preparation (hoisted out of the per-call path).
    tab, meta = prepare_combined_table(atom_tab, in_tab, out_tab)
    tab = jax.block_until_ready(tab)

    out = graph_node_feature(x, in_degree, out_degree, tab, meta)
    out = jax.block_until_ready(out)
    assert out.shape == (G, N, hidden_dim)

    # Reference 1: same bf16 table quantization as the kernel (tight check --
    # counts x bf16 products are exact in f32, only accumulation order differs).
    q = lambda t: t.astype(jnp.bfloat16).astype(jnp.float32)
    ref_bf16 = (jnp.take(q(atom_tab), x, axis=0).sum(axis=-2)
                + jnp.take(q(in_tab), in_degree, axis=0)
                + jnp.take(q(out_tab), out_degree, axis=0))
    assert jnp.allclose(out, ref_bf16, atol=1e-5, rtol=1e-5)

    # Reference 2: full-f32 PyTorch semantics (loose check; bf16 table rounding).
    ref_f32 = (jnp.take(atom_tab, x, axis=0).sum(axis=-2)
               + jnp.take(in_tab, in_degree, axis=0)
               + jnp.take(out_tab, out_degree, axis=0))
    assert jnp.allclose(out, ref_f32, atol=5e-3, rtol=5e-2)

    print("KERNEL_OK")
</pallas_src>

<mosaic_0001>
module attributes {stable_mosaic.version = 11 : i64} {
  func.func @_node_feature_kernel(%arg0: i32, %arg1: memref<16x5xi32, #tpu.memory_space<vmem>>, %arg2: memref<128x128xbf16, #tpu.memory_space<vmem>>, %arg3: memref<16x128xf32, #tpu.memory_space<vmem>>) attributes {dimension_semantics = [#tpu.dimension_semantics<parallel>], iteration_bounds = array<i64: 1>, scalar_prefetch = 0 : i64, scratch_operands = 0 : i64, tpu.core_type = #tpu.core_type<tc>, window_params = [{transform_indices = @transform_0, window_bounds = array<i64: 16, 5>}, {pipeline_mode = #tpu.pipeline_mode<synchronous>, transform_indices = @transform_1, window_bounds = array<i64: 128, 128>}, {transform_indices = @transform_2, window_bounds = array<i64: 16, 128>}]} {
    %c0 = arith.constant 0 : index
    %c0_0 = arith.constant 0 : index
    %0 = vector.load %arg1[%c0, %c0_0] : memref<16x5xi32, #tpu.memory_space<vmem>>, vector<16x5xi32>
    %1 = tpu.iota {dimensions = array<i32: 1>} : vector<16x128xi32>
    %cst = arith.constant 0.000000e+00 : f32
    %2 = vector.broadcast %cst : f32 to vector<16x128xf32>
    %3 = vector.extract_strided_slice %0 {offsets = [0, 0], sizes = [16, 1], strides = [1, 1]} : vector<16x5xi32> to vector<16x1xi32>
    %4 = vector.broadcast %3 : vector<16x1xi32> to vector<16x128xi32>
    %5 = arith.cmpi eq, %4, %1 : vector<16x128xi32>
    %6 = arith.extui %5 : vector<16x128xi1> to vector<16x128xi32>
    %7 = arith.sitofp %6 : vector<16x128xi32> to vector<16x128xf32>
    %8 = arith.addf %2, %7 : vector<16x128xf32>
    %9 = vector.extract_strided_slice %0 {offsets = [0, 1], sizes = [16, 1], strides = [1, 1]} : vector<16x5xi32> to vector<16x1xi32>
    %10 = vector.broadcast %9 : vector<16x1xi32> to vector<16x128xi32>
    %11 = arith.cmpi eq, %10, %1 : vector<16x128xi32>
    %12 = arith.extui %11 : vector<16x128xi1> to vector<16x128xi32>
    %13 = arith.sitofp %12 : vector<16x128xi32> to vector<16x128xf32>
    %14 = arith.addf %8, %13 : vector<16x128xf32>
    %15 = vector.extract_strided_slice %0 {offsets = [0, 2], sizes = [16, 1], strides = [1, 1]} : vector<16x5xi32> to vector<16x1xi32>
    %16 = vector.broadcast %15 : vector<16x1xi32> to vector<16x128xi32>
    %17 = arith.cmpi eq, %16, %1 : vector<16x128xi32>
    %18 = arith.extui %17 : vector<16x128xi1> to vector<16x128xi32>
    %19 = arith.sitofp %18 : vector<16x128xi32> to vector<16x128xf32>
    %20 = arith.addf %14, %19 : vector<16x128xf32>
    %21 = vector.extract_strided_slice %0 {offsets = [0, 3], sizes = [16, 1], strides = [1, 1]} : vector<16x5xi32> to vector<16x1xi32>
    %22 = vector.broadcast %21 : vector<16x1xi32> to vector<16x128xi32>
    %23 = arith.cmpi eq, %22, %1 : vector<16x128xi32>
    %24 = arith.extui %23 : vector<16x128xi1> to vector<16x128xi32>
    %25 = arith.sitofp %24 : vector<16x128xi32> to vector<16x128xf32>
    %26 = arith.addf %20, %25 : vector<16x128xf32>
    %27 = vector.extract_strided_slice %0 {offsets = [0, 4], sizes = [16, 1], strides = [1, 1]} : vector<16x5xi32> to vector<16x1xi32>
    %28 = vector.broadcast %27 : vector<16x1xi32> to vector<16x128xi32>
    %29 = arith.cmpi eq, %28, %1 : vector<16x128xi32>
    %30 = arith.extui %29 : vector<16x128xi1> to vector<16x128xi32>
    %31 = arith.sitofp %30 : vector<16x128xi32> to vector<16x128xf32>
    %32 = arith.addf %26, %31 : vector<16x128xf32>
    %33 = arith.truncf %32 : vector<16x128xf32> to vector<16x128xbf16>
    %c0_1 = arith.constant 0 : index
    %c0_2 = arith.constant 0 : index
    %34 = vector.load %arg2[%c0_1, %c0_2] : memref<128x128xbf16, #tpu.memory_space<vmem>>, vector<128x128xbf16>
    %cst_3 = arith.constant dense<0.000000e+00> : vector<16x128xf32>
    %35 = tpu.matmul %33, %34, %cst_3 {dimension_numbers = #tpu.dot_dimension_numbers<[1], [0], [0], [1], [0, 0, 1, 1], [], []>} : vector<16x128xbf16>, vector<128x128xbf16>, vector<16x128xf32> -> vector<16x128xf32>
    %c0_4 = arith.constant 0 : index
    %c0_5 = arith.constant 0 : index
    %36 = vector.load %arg3[%c0_4, %c0_5] : memref<16x128xf32, #tpu.memory_space<vmem>>, vector<16x128xf32>
    tpu.vector_store %arg3[%c0_4, %c0_5], %35 {strides = array<i32>} : memref<16x128xf32, #tpu.memory_space<vmem>>, vector<16x128xf32>,
    return
  }
  func.func @transform_0(%arg0: i32) -> (i32, i32) {
    %c0_i32 = arith.constant 0 : i32
    %c0_i32_0 = arith.constant 0 : i32
    return %arg0, %c0_i32 : i32, i32
  }
  func.func @transform_1(%arg0: i32) -> (i32, i32) {
    %c0_i32 = arith.constant 0 : i32
    %c0_i32_0 = arith.constant 0 : i32
    %c0_i32_1 = arith.constant 0 : i32
    return %c0_i32, %c0_i32_0 : i32, i32
  }
  func.func @transform_2(%arg0: i32) -> (i32, i32) {
    %c0_i32 = arith.constant 0 : i32
    %c0_i32_0 = arith.constant 0 : i32
    return %arg0, %c0_i32 : i32, i32
  }
}

</mosaic_0001>

<llo_original>
// kernel: tpu_custom_call.1
$region0: #{tpu_custom_call.1}
  #allocation0 [shape = 'u32[]', space=smem, size = 0x4, offset = 0x4, fixed_abs, tag = 'smem constant byte address 0x4 - core index']
  #allocation1 [shape = 'u32[144,128]{1,0:T(1,128)}', space=vmem, size = 0x12000, scoped, tag = 'internal scratch']
  %s0 = inlined_call_operand.vmem [shape: s32[16,5], index: 0, kind: input, shape index: {}]
  %s1 = inlined_call_operand.hbm [shape: bf16[128,128], index: 1, kind: input, shape index: {}]
  %s2 = inlined_call_operand.hbm [shape: f32[16,128], index: 2, kind: output, shape index: {}]
  %s3 = sld [smem:[#allocation0]]
  $region22: #{tpu_custom_call.1} parent=0
    _
  %s5 = ssub.s32 1, %s3
  %s6 = scalar_select 0, %s5, %s3
  $region1: #{tpu_custom_call.1} parent=0
    #allocation2 [shape = 'u8[32768]{0}', space=vmem, size = 0x8000, scoped, tag = 'input window, operand 1, single buffered']
    #allocation3 [shape = 's32[1]{0}', space=sflag, size = 0x4, scoped, tag = 'scoped memory for tpu_custom_call.1']
    #allocation4 [shape = 's32[1]{0}', space=sflag, size = 0x4, scoped, tag = 'scoped memory for tpu_custom_call.1']
    #allocation5 [shape = 'u8[8192]{0}', space=vmem, size = 0x2000, scoped, tag = 'output window, operand 0, single buffered']
    %7 = vsyncpa [#allocation3], 0
    %8 = vsyncpa [#allocation4], 0
    // Predicated region
    $region2: #{tpu_custom_call.1} parent=1 // pred_check
      _
    $region3: #{tpu_custom_call.1} parent=1 // pred_check_branch
      %10 = sbr.rel (0) target = $region5
    $region4: #{tpu_custom_call.1} parent=1 // pred_region
      _
    $region5: #{tpu_custom_call.1} parent=1 // pred_fallthru
      _
    // Predicated region
    $region6: #{tpu_custom_call.1} parent=1 // pred_check
      _
    $region7: #{tpu_custom_call.1} parent=1 // pred_check_branch
      %12 = sbr.rel (0) target = $region9
    $region8: #{tpu_custom_call.1} parent=1 // pred_region
      %s14 = ssub.s32 1024, 1024
      %15 = vsyncadd [#allocation3], %s14
      %s16 = sshll.u32 [#allocation2], 4
      %s17 = int_to_ptr.vmem [resolvable:$true] %s16
      %22 = dma.hbm_to_vmem [thread:$0]  %s1, 1024, %s17, [#allocation3], 64, 64, 4
    $region9: #{tpu_custom_call.1} parent=1 // pred_fallthru
      _
    // Predicated region
    $region10: #{tpu_custom_call.1} parent=1 // pred_check
      _
    $region11: #{tpu_custom_call.1} parent=1 // pred_check_branch
      %24 = sbr.rel (0) target = $region13
    $region12: #{tpu_custom_call.1} parent=1 // pred_region
      %25 = dma.done [#allocation3], 1024
    $region13: #{tpu_custom_call.1} parent=1 // pred_fallthru
      _
    %v27 = vld [vmem:[%s0] sm:$0xff]
    %v28 = vld [vmem:[%s0 + $0x8] sm:$0xff]
    %v29 = vlaneseq
    %v30 = vand.u32 %v29, 127
    %31 = vset.pattern.permute.xlu0 0
    %32 = vperm.xlu0 %31, %v27
    %v33 = vpop.permute.xlu0 %32
    %34 = vset.pattern.permute.xlu0 0
    %35 = vperm.xlu0 %34, %v28
    %v36 = vpop.permute.xlu0 %35
    %vm37 = vcmp.eq.s32.totalorder %v33, %v30
    %vm38 = vcmp.eq.s32.totalorder %v36, %v30
    %v39 = vsel %vm37, 1, 0
    %v40 = vsel %vm38, 1, 0
    %v41 = vcvt.s32.f32 %v39
    %v42 = vcvt.s32.f32 %v40
    %v43 = vadd.f32 %v41, 0.0
    %v44 = vadd.f32 %v42, 0.0
    %45 = vset.pattern.permute.xlu0 1
    %46 = vperm.xlu0 %45, %v27
    %v47 = vpop.permute.xlu0 %46
    %48 = vset.pattern.permute.xlu0 1
    %49 = vperm.xlu0 %48, %v28
    %v50 = vpop.permute.xlu0 %49
    %vm51 = vcmp.eq.s32.totalorder %v47, %v30
    %vm52 = vcmp.eq.s32.totalorder %v50, %v30
    %v53 = vsel %vm51, 1, 0
    %v54 = vsel %vm52, 1, 0
    %v55 = vcvt.s32.f32 %v53
    %v56 = vcvt.s32.f32 %v54
    %v57 = vadd.f32 %v43, %v55
    %v58 = vadd.f32 %v44, %v56
    %59 = vset.pattern.permute.xlu0 2
    %60 = vperm.xlu0 %59, %v27
    %v61 = vpop.permute.xlu0 %60
    %62 = vset.pattern.permute.xlu0 2
    %63 = vperm.xlu0 %62, %v28
    %v64 = vpop.permute.xlu0 %63
    %vm65 = vcmp.eq.s32.totalorder %v61, %v30
    %vm66 = vcmp.eq.s32.totalorder %v64, %v30
    %v67 = vsel %vm65, 1, 0
    %v68 = vsel %vm66, 1, 0
    %v69 = vcvt.s32.f32 %v67
    %v70 = vcvt.s32.f32 %v68
    %v71 = vadd.f32 %v57, %v69
    %v72 = vadd.f32 %v58, %v70
    %73 = vset.pattern.permute.xlu0 3
    %74 = vperm.xlu0 %73, %v27
    %v75 = vpop.permute.xlu0 %74
    %76 = vset.pattern.permute.xlu0 3
    %77 = vperm.xlu0 %76, %v28
    %v78 = vpop.permute.xlu0 %77
    %vm79 = vcmp.eq.s32.totalorder %v75, %v30
    %vm80 = vcmp.eq.s32.totalorder %v78, %v30
    %v81 = vsel %vm79, 1, 0
    %v82 = vsel %vm80, 1, 0
    %v83 = vcvt.s32.f32 %v81
    %v84 = vcvt.s32.f32 %v82
    %v85 = vadd.f32 %v71, %v83
    %v86 = vadd.f32 %v72, %v84
    %87 = vset.pattern.permute.xlu0 4
    %88 = vperm.xlu0 %87, %v27
    %v89 = vpop.permute.xlu0 %88
    %90 = vset.pattern.permute.xlu0 4
    %91 = vperm.xlu0 %90, %v28
    %v92 = vpop.permute.xlu0 %91
    %vm93 = vcmp.eq.s32.totalorder %v89, %v30
    %vm94 = vcmp.eq.s32.totalorder %v92, %v30
    %v95 = vsel %vm93, 1, 0
    %v96 = vsel %vm94, 1, 0
    %v97 = vcvt.s32.f32 %v95
    %v98 = vcvt.s32.f32 %v96
    %v99 = vadd.f32 %v85, %v97
    %v100 = vadd.f32 %v86, %v98
    %v101 = vpack.c.bf16 %v100, %v99
    %v102 = vld [vmem:[#allocation2] sm:$0xf]
    %v103 = vld [vmem:[#allocation2 + $0x4] sm:$0xf]
    %v104 = vld [vmem:[#allocation2 + $0x8] sm:$0xf]
    %v105 = vld [vmem:[#allocation2 + $0xc] sm:$0xf]
    %v106 = vld [vmem:[#allocation2 + $0x10] sm:$0xf]
    %v107 = vld [vmem:[#allocation2 + $0x14] sm:$0xf]
    %v108 = vld [vmem:[#allocation2 + $0x18] sm:$0xf]
    %v109 = vld [vmem:[#allocation2 + $0x1c] sm:$0xf]
    %v110 = vld [vmem:[#allocation2 + $0x20] sm:$0xf]
    %v111 = vld [vmem:[#allocation2 + $0x24] sm:$0xf]
    %v112 = vld [vmem:[#allocation2 + $0x28] sm:$0xf]
    %v113 = vld [vmem:[#allocation2 + $0x2c] sm:$0xf]
    %v114 = vld [vmem:[#allocation2 + $0x30] sm:$0xf]
    %v115 = vld [vmem:[#allocation2 + $0x34] sm:$0xf]
    %v116 = vld [vmem:[#allocation2 + $0x38] sm:$0xf]
    %v117 = vld [vmem:[#allocation2 + $0x3c] sm:$0xf]
    %v134 = vunpack.c.l.b16 %v102
    %v135 = vunpack.c.l.b16 %v103
    %v136 = vunpack.c.l.b16 %v104
    %v137 = vunpack.c.l.b16 %v105
    %v138 = vunpack.c.l.b16 %v106
    %v139 = vunpack.c.l.b16 %v107
    %v140 = vunpack.c.l.b16 %v108
    %v141 = vunpack.c.l.b16 %v109
    %v142 = vunpack.c.l.b16 %v110
    %v143 = vunpack.c.l.b16 %v111
    %v144 = vunpack.c.l.b16 %v112
    %v145 = vunpack.c.l.b16 %v113
    %v146 = vunpack.c.l.b16 %v114
    %v147 = vunpack.c.l.b16 %v115
    %v148 = vunpack.c.l.b16 %v116
    %v149 = vunpack.c.l.b16 %v117
    %v150 = vpack.c.b16 %v135, %v134
    %v151 = vpack.c.b16 %v137, %v136
    %v152 = vpack.c.b16 %v139, %v138
    %v153 = vpack.c.b16 %v141, %v140
    %v154 = vpack.c.b16 %v143, %v142
    %v155 = vpack.c.b16 %v145, %v144
    %v156 = vpack.c.b16 %v147, %v146
    %v157 = vpack.c.b16 %v149, %v148
    %166 = vmatprep.subr.bf16.mxu0 0
    %167 = vmatpush1.bf16.msra.mxu0 %v150
    %168 = vmatprep.subr.bf16.mxu0 0
    %169 = vmatpush1.bf16.msra.mxu0 %v151
    %170 = vmatprep.subr.bf16.mxu0 0
    %171 = vmatpush1.bf16.msra.mxu0 %v152
    %172 = vmatprep.subr.bf16.mxu0 0
    %173 = vmatpush1.bf16.msra.mxu0 %v153
    %174 = vmatprep.subr.bf16.mxu0 0
    %175 = vmatpush1.bf16.msra.mxu0 %v154
    %176 = vmatprep.subr.bf16.mxu0 0
    %177 = vmatpush1.bf16.msra.mxu0 %v155
    %178 = vmatprep.subr.bf16.mxu0 0
    %179 = vmatpush1.bf16.msra.mxu0 %v156
    %180 = vmatprep.subr.bf16.mxu0 0
    %181 = vmatpush1.bf16.msra.mxu0 %v157
    %182 = vmatprep.subr.bf16.mxu0 0
    %183 = vmatpush1.bf16.msra.mxu0 0
    %184 = vmatprep.subr.bf16.mxu0 0
    %185 = vmatpush1.bf16.msra.mxu0 0
    %186 = vmatprep.subr.bf16.mxu0 0
    %187 = vmatpush1.bf16.msra.mxu0 0
    %188 = vmatprep.subr.bf16.mxu0 0
    %189 = vmatpush1.bf16.msra.mxu0 0
    %190 = vmatprep.subr.bf16.mxu0 0
    %191 = vmatpush1.bf16.msra.mxu0 0
    %192 = vmatprep.subr.bf16.mxu0 0
    %193 = vmatpush1.bf16.msra.mxu0 0
    %194 = vmatprep.subr.bf16.mxu0 0
    %195 = vmatpush1.bf16.msra.mxu0 0
    %196 = vmatprep.subr.bf16.mxu0 0
    %197 = vmatpush1.bf16.msra.mxu0 0
    %198 = vmatprep.mubr.bf16.mxu0 0
    %199 = vmatmul.mubr.bf16.gmra.mrb[0].mxu0 %v101
    %v200 = vpop.f32.mrb[0].mxu0
    %v201 = vadd.f32 0.0, %v200
    %v202 = vpop.f32.mrb[0].mxu0
    %v203 = vpop.f32.mrb[0].mxu0
    %v204 = vadd.f32 0.0, %v203
    %v205 = vpop.f32.mrb[0].mxu0
    %206 = vdwg.mxu0
    %207 = vst [vmem:[#allocation5] sm:$0xff] %v201
    %208 = vst [vmem:[#allocation5 + $0x8] sm:$0xff] %v204
    // Predicated region
    $region14: #{tpu_custom_call.1} parent=1 // pred_check
      _
    $region15: #{tpu_custom_call.1} parent=1 // pred_check_branch
      %210 = sbr.rel (0) target = $region17
    $region16: #{tpu_custom_call.1} parent=1 // pred_region
      %s212 = ssub.s32 256, 256
      %213 = vsyncadd [#allocation4], %s212
      %s214 = sshll.u32 [#allocation5], 4
      %s215 = int_to_ptr.vmem [resolvable:$true] %s214
      %220 = dma.vmem_to_hbm [thread:$0]  %s215, 256, %s2, [#allocation4], 128, 128, 8
    $region17: #{tpu_custom_call.1} parent=1 // pred_fallthru
      _
    // Predicated region
    $region18: #{tpu_custom_call.1} parent=1 // pred_check
      _
    $region19: #{tpu_custom_call.1} parent=1 // pred_check_branch
      %222 = sbr.rel (0) target = $region21
    $region20: #{tpu_custom_call.1} parent=1 // pred_region
      %223 = dma.done [#allocation4], 256
    $region21: #{tpu_custom_call.1} parent=1 // pred_fallthru
      _
    %224 = vsyncpa [#allocation3], 1
    %225 = vsyncpa [#allocation4], 1

</llo_original>
